<compile_context>
chip_gen: v5e
topology: v5e:2x2
jax: 0.10.0
libtpu: 0.0.40
codegen_flags: <defaults>
</compile_context>

<pallas_src>
import math

import jax
import jax.numpy as jnp
from jax.experimental import pallas as pl
from jax.experimental.pallas import tpu as pltpu


def _plseu_kernel(x_ref, alpha_ref, o_ref):
    # alpha_ref: (1, Dp) f32, already clamped to alpha_min in the wrapper.
    # x_ref / o_ref: (TILE_R, Dp) tiles in the caller's dtype.
    a = alpha_ref[...]                      # (1, Dp) — alpha-only math, tiny
    inv_a = 1.0 / a                         # hoisted: one reciprocal per lane
    x = x_ref[...].astype(jnp.float32)      # upcast for transcendentals
    x_over_a = x * inv_a
    x1 = jax.nn.sigmoid(x_over_a) * x
    x2 = a * (a + jnp.log1p(jnp.maximum(x_over_a - a, 0.0)))
    o_ref[...] = jnp.minimum(x1, x2).astype(o_ref.dtype)


def plseu(x, alpha, alpha_min_value=0.001):
    """PLSEU activation. x: (..., D), alpha: (D,). Output keeps x.dtype."""
    orig_shape = x.shape
    out_dtype = x.dtype
    D = orig_shape[-1]
    assert alpha.shape == (D,)
    total = math.prod(orig_shape)

    # Lane-dense packing: make the kernel's last dim a multiple of 128 lanes.
    k = 1 if D % 128 == 0 else 128 // math.gcd(D, 128)
    Dp = k * D

    # Clamp alpha once (forward clamps the parameter before use), tile k times
    # so lane j sees alpha[j % D], matching the packed layout.
    a_row = jnp.tile(
        jnp.maximum(alpha.astype(jnp.float32), jnp.float32(alpha_min_value)), k
    ).reshape(1, Dp)

    rows = -(-total // Dp)                       # packed rows needed

    # Row tile targeting ~2 MiB of x per block, sublane (8) aligned.
    bytes_per_row = Dp * jnp.dtype(out_dtype).itemsize
    target_rows = max(8, min(1024, (2 * 1024 * 1024) // bytes_per_row))
    target_rows = (target_rows // 8) * 8
    rows_ceil8 = -(-rows // 8) * 8
    tile_r = min(target_rows, rows_ceil8)

    rows_padded = -(-rows // tile_r) * tile_r    # make the grid exact
    pad = rows_padded * Dp - total

    flat = x.reshape(-1)
    if pad:
        flat = jnp.concatenate([flat, jnp.zeros((pad,), dtype=out_dtype)])
    x2d = flat.reshape(rows_padded, Dp)

    grid = (rows_padded // tile_r,)

    out = pl.pallas_call(
        _plseu_kernel,
        out_shape=jax.ShapeDtypeStruct((rows_padded, Dp), out_dtype),
        grid_spec=pltpu.PrefetchScalarGridSpec(
            num_scalar_prefetch=0,
            grid=grid,
            in_specs=[
                pl.BlockSpec((tile_r, Dp), lambda i: (i, 0)),   # x row tiles
                pl.BlockSpec((1, Dp), lambda i: (0, 0)),        # alpha, resident
            ],
            out_specs=pl.BlockSpec((tile_r, Dp), lambda i: (i, 0)),
        ),
        compiler_params=pltpu.CompilerParams(
            dimension_semantics=("parallel",)),
    )(x2d, a_row)

    out_flat = out.reshape(-1)
    if pad:
        out_flat = out_flat[:total]
    return out_flat.reshape(orig_shape)


def plseu_reference(x, alpha, alpha_min_value=0.001):
    a = jnp.maximum(alpha, alpha_min_value)
    x1 = jax.nn.sigmoid(x / a) * x
    x2 = a * (a + jnp.log(1.0 + jax.nn.relu(x / a - a)))
    return jnp.minimum(x1, x2)


if __name__ == "__main__":
    key = jax.random.PRNGKey(0)
    batch, seq, hidden = 2, 8, 32   # input_dim = hidden = 32
    x = jax.random.normal(key, (batch, seq, hidden), dtype=jnp.float32) * 3.0

    # Deterministic parameter init matching constant_(alpha, 4.4)
    alpha = jnp.full((hidden,), 4.4, dtype=jnp.float32)

    # f32 path
    out = plseu(x, alpha)
    jax.block_until_ready(out)
    ref = plseu_reference(x, alpha)
    assert out.shape == x.shape and out.dtype == x.dtype
    assert jnp.allclose(out, ref, atol=1e-5, rtol=1e-5), "f32 mismatch vs reference"

    # bf16 I/O path (kernel upcasts internally; output stays bf16)
    x_bf16 = x.astype(jnp.bfloat16)
    out_bf16 = plseu(x_bf16, alpha)
    jax.block_until_ready(out_bf16)
    ref_bf16 = plseu_reference(x_bf16.astype(jnp.float32), alpha)
    assert out_bf16.dtype == jnp.bfloat16 and out_bf16.shape == x.shape
    assert jnp.allclose(out_bf16.astype(jnp.float32), ref_bf16,
                        atol=5e-2, rtol=5e-2), "bf16 mismatch vs reference"

    print("KERNEL_OK")
</pallas_src>

<mosaic_0001>
module attributes {stable_mosaic.version = 11 : i64} {
  func.func @_plseu_kernel(%arg0: i32, %arg1: memref<8x128xf32, #tpu.memory_space<vmem>>, %arg2: memref<1x128xf32, #tpu.memory_space<vmem>>, %arg3: memref<8x128xf32, #tpu.memory_space<vmem>>) attributes {dimension_semantics = [#tpu.dimension_semantics<parallel>], iteration_bounds = array<i64: 1>, scalar_prefetch = 0 : i64, scratch_operands = 0 : i64, tpu.core_type = #tpu.core_type<tc>, window_params = [{transform_indices = @transform_0, window_bounds = array<i64: 8, 128>}, {pipeline_mode = #tpu.pipeline_mode<synchronous>, transform_indices = @transform_1, window_bounds = array<i64: 1, 128>}, {transform_indices = @transform_2, window_bounds = array<i64: 8, 128>}]} {
    %c0 = arith.constant 0 : index
    %c0_0 = arith.constant 0 : index
    %0 = vector.load %arg2[%c0, %c0_0] : memref<1x128xf32, #tpu.memory_space<vmem>>, vector<1x128xf32>
    %cst = arith.constant 1.000000e+00 : f32
    %1 = vector.broadcast %cst : f32 to vector<1x128xf32>
    %2 = arith.divf %1, %0 : vector<1x128xf32>
    %c0_1 = arith.constant 0 : index
    %c0_2 = arith.constant 0 : index
    %3 = vector.load %arg1[%c0_1, %c0_2] : memref<8x128xf32, #tpu.memory_space<vmem>>, vector<8x128xf32>
    %4 = vector.broadcast %2 : vector<1x128xf32> to vector<8x128xf32>
    %5 = arith.mulf %3, %4 : vector<8x128xf32>
    %6 = arith.negf %5 : vector<8x128xf32>
    %7 = math.exp %6 : vector<8x128xf32>
    %cst_3 = arith.constant 1.000000e+00 : f32
    %8 = vector.broadcast %cst_3 : f32 to vector<8x128xf32>
    %9 = arith.addf %8, %7 : vector<8x128xf32>
    %10 = arith.divf %8, %9 : vector<8x128xf32>
    %11 = arith.mulf %10, %3 : vector<8x128xf32>
    %12 = vector.broadcast %0 : vector<1x128xf32> to vector<8x128xf32>
    %13 = arith.subf %5, %12 : vector<8x128xf32>
    %cst_4 = arith.constant 0.000000e+00 : f32
    %14 = vector.broadcast %cst_4 : f32 to vector<8x128xf32>
    %15 = arith.maximumf %13, %14 : vector<8x128xf32>
    %16 = math.log1p %15 : vector<8x128xf32>
    %17 = vector.broadcast %0 : vector<1x128xf32> to vector<8x128xf32>
    %18 = arith.addf %17, %16 : vector<8x128xf32>
    %19 = vector.broadcast %0 : vector<1x128xf32> to vector<8x128xf32>
    %20 = arith.mulf %19, %18 : vector<8x128xf32>
    %21 = arith.minimumf %11, %20 : vector<8x128xf32>
    %c0_5 = arith.constant 0 : index
    %c0_6 = arith.constant 0 : index
    %22 = vector.load %arg3[%c0_5, %c0_6] : memref<8x128xf32, #tpu.memory_space<vmem>>, vector<8x128xf32>
    tpu.vector_store %arg3[%c0_5, %c0_6], %21 {strides = array<i32>} : memref<8x128xf32, #tpu.memory_space<vmem>>, vector<8x128xf32>,
    return
  }
  func.func @transform_0(%arg0: i32) -> (i32, i32) {
    %c0_i32 = arith.constant 0 : i32
    %c0_i32_0 = arith.constant 0 : i32
    return %arg0, %c0_i32 : i32, i32
  }
  func.func @transform_1(%arg0: i32) -> (i32, i32) {
    %c0_i32 = arith.constant 0 : i32
    %c0_i32_0 = arith.constant 0 : i32
    %c0_i32_1 = arith.constant 0 : i32
    return %c0_i32, %c0_i32_0 : i32, i32
  }
  func.func @transform_2(%arg0: i32) -> (i32, i32) {
    %c0_i32 = arith.constant 0 : i32
    %c0_i32_0 = arith.constant 0 : i32
    return %arg0, %c0_i32 : i32, i32
  }
}

</mosaic_0001>

<llo_original>
// kernel: tpu_custom_call.1
$region0: #{tpu_custom_call.1}
  #allocation0 [shape = 'u32[]', space=smem, size = 0x4, offset = 0x4, fixed_abs, tag = 'smem constant byte address 0x4 - core index']
  #allocation1 [shape = 'u32[72,128]{1,0:T(1,128)}', space=vmem, size = 0x9000, scoped, tag = 'internal scratch']
  %s0 = inlined_call_operand.hbm [shape: f32[8,128], index: 0, kind: input, shape index: {}]
  %s1 = inlined_call_operand.hbm [shape: f32[1,128], index: 1, kind: input, shape index: {}]
  %s2 = inlined_call_operand.hbm [shape: f32[8,128], index: 2, kind: output, shape index: {}]
  %s3 = sld [smem:[#allocation0]]
  $region26: #{tpu_custom_call.1} parent=0
    _
  %s5 = ssub.s32 1, %s3
  %s6 = scalar_select 0, %s5, %s3
  $region1: #{tpu_custom_call.1} parent=0
    #allocation2 [shape = 'u8[4096]{0}', space=vmem, size = 0x1000, scoped, tag = 'input window, operand 0, single buffered']
    #allocation3 [shape = 's32[1]{0}', space=sflag, size = 0x4, scoped, tag = 'scoped memory for tpu_custom_call.1']
    #allocation4 [shape = 's32[1]{0}', space=sflag, size = 0x4, scoped, tag = 'scoped memory for tpu_custom_call.1']
    #allocation5 [shape = 'u8[512]{0}', space=vmem, size = 0x400, scoped, tag = 'input window, operand 1, single buffered']
    #allocation6 [shape = 's32[1]{0}', space=sflag, size = 0x4, scoped, tag = 'scoped memory for tpu_custom_call.1']
    #allocation7 [shape = 'u8[4096]{0}', space=vmem, size = 0x1000, scoped, tag = 'output window, operand 0, single buffered']
    %7 = vsyncpa [#allocation3], 0
    %8 = vsyncpa [#allocation6], 0
    %9 = vsyncpa [#allocation4], 0
    // Predicated region
    $region2: #{tpu_custom_call.1} parent=1 // pred_check
      _
    $region3: #{tpu_custom_call.1} parent=1 // pred_check_branch
      %11 = sbr.rel (0) target = $region5
    $region4: #{tpu_custom_call.1} parent=1 // pred_region
      %13 = vsyncadd [#allocation3], 0
      %s15 = sshll.u32 %s0, 4
      %s16 = int_to_ptr.hbm [resolvable:$true] %s15
      %s17 = sshll.u32 [#allocation2], 4
      %s18 = int_to_ptr.vmem [resolvable:$true] %s17
      %20 = dma.hbm_to_vmem [thread:$0]  %s16, 128, %s18, [#allocation3]
    $region5: #{tpu_custom_call.1} parent=1 // pred_fallthru
      _
    // Predicated region
    $region6: #{tpu_custom_call.1} parent=1 // pred_check
      _
    $region7: #{tpu_custom_call.1} parent=1 // pred_check_branch
      %22 = sbr.rel (0) target = $region9
    $region8: #{tpu_custom_call.1} parent=1 // pred_region
      %24 = vsyncadd [#allocation6], 0
      %s26 = sshll.u32 %s1, 4
      %s27 = int_to_ptr.hbm [resolvable:$true] %s26
      %s28 = sshll.u32 [#allocation5], 4
      %s29 = int_to_ptr.vmem [resolvable:$true] %s28
      %31 = dma.hbm_to_vmem [thread:$0]  %s27, 16, %s29, [#allocation6]
    $region9: #{tpu_custom_call.1} parent=1 // pred_fallthru
      _
    // Predicated region
    $region10: #{tpu_custom_call.1} parent=1 // pred_check
      _
    $region11: #{tpu_custom_call.1} parent=1 // pred_check_branch
      %33 = sbr.rel (0) target = $region13
    $region12: #{tpu_custom_call.1} parent=1 // pred_region
      %35 = dma.done [#allocation3], 128
    $region13: #{tpu_custom_call.1} parent=1 // pred_fallthru
      _
    // Predicated region
    $region14: #{tpu_custom_call.1} parent=1 // pred_check
      _
    $region15: #{tpu_custom_call.1} parent=1 // pred_check_branch
      %37 = sbr.rel (0) target = $region17
    $region16: #{tpu_custom_call.1} parent=1 // pred_region
      %39 = dma.done [#allocation6], 16
    $region17: #{tpu_custom_call.1} parent=1 // pred_fallthru
      _
    %v40 = vld [vmem:[#allocation5] sm:$0x1]
    %v41 = vrcp.pop %v40
    %v42 = vmul.f32 %v40, %v41
    %v43 = vsub.f32 1.0, %v42
    %v44 = vmul.f32 %v41, %v43
    %v45 = vadd.f32 %v41, %v44
    %vm46 = vweird.f32 %v40
    %vm47 = vweird.f32 %v41
    %vm48 = vmor %vm46, %vm47
    %v49 = vsel %vm48, %v41, %v45
    %v50 = vand.u32 2147483647, %v40
    %vm51 = vcmp.eq.f32.partialorder %v50, 8.507059e+37
    %v52 = vand.u32 %v40, 2147483648
    %v53 = vor.u32 1.1754944e-38, %v52
    %v54 = vsel %vm51, %v53, %v49
    %v55 = vmul.f32 1.0, %v54
    %v56 = vld [vmem:[#allocation2] sm:$0xff]
    %v58 = vperm.slane %v55, 0
    %v60 = vmul.f32 %v56, %v58
    %v61 = vxor.u32 %v60, 2147483648
    %v62 = vmul.f32 %v61, 1.442695
    %v63 = vpow.pop %v62
    %v64 = vadd.f32 %v63, 1.0
    %v65 = vrcp.pop %v64
    %v66 = vmul.f32 %v64, %v65
    %v67 = vsub.f32 1.0, %v66
    %v68 = vmul.f32 %v65, %v67
    %v69 = vadd.f32 %v65, %v68
    %vm70 = vweird.f32 %v64
    %vm71 = vweird.f32 %v65
    %vm72 = vmor %vm70, %vm71
    %v73 = vsel %vm72, %v65, %v69
    %v74 = vand.u32 2147483647, %v64
    %vm75 = vcmp.eq.f32.partialorder %v74, 8.507059e+37
    %v76 = vand.u32 %v64, 2147483648
    %v77 = vor.u32 1.1754944e-38, %v76
    %v78 = vsel %vm75, %v77, %v73
    %v79 = vmul.f32 1.0, %v78
    %v80 = vmul.f32 %v79, %v56
    %v82 = vperm.slane %v40, 0
    %v84 = vsub.f32 %v60, %v82
    %v85 = vmax.f32 %v84, 0.0
    %v86 = vadd.f32 %v85, 1.0
    %v87 = vlog2.pop %v86
    %v88 = vmul.f32 %v87, 0.6931472
    %v89 = vmul.f32 -0.5, %v85
    %v90 = vadd.f32 %v89, 1.0
    %v91 = vmul.f32 %v90, %v85
    %v92 = vand.u32 2147483647, %v85
    %vm93 = vcmp.lt.f32.partialorder %v92, 0.0004427343
    %v94 = vsel %vm93, %v91, %v88
    %v95 = vadd.f32 %v82, %v94
    %v96 = vmul.f32 %v82, %v95
    %v97 = vmin.f32 %v80, %v96
    %98 = vst [vmem:[#allocation7] sm:$0xff] %v97
    // Predicated region
    $region18: #{tpu_custom_call.1} parent=1 // pred_check
      _
    $region19: #{tpu_custom_call.1} parent=1 // pred_check_branch
      %100 = sbr.rel (0) target = $region21
    $region20: #{tpu_custom_call.1} parent=1 // pred_region
      %102 = vsyncadd [#allocation4], 0
      %s104 = sshll.u32 [#allocation7], 4
      %s105 = int_to_ptr.vmem [resolvable:$true] %s104
      %s106 = sshll.u32 %s2, 4
      %s107 = int_to_ptr.hbm [resolvable:$true] %s106
      %109 = dma.vmem_to_hbm [thread:$0]  %s105, 128, %s107, [#allocation4]
    $region21: #{tpu_custom_call.1} parent=1 // pred_fallthru
      _
    // Predicated region
    $region22: #{tpu_custom_call.1} parent=1 // pred_check
      _
    $region23: #{tpu_custom_call.1} parent=1 // pred_check_branch
      %111 = sbr.rel (0) target = $region25
    $region24: #{tpu_custom_call.1} parent=1 // pred_region
      %113 = dma.done [#allocation4], 128
    $region25: #{tpu_custom_call.1} parent=1 // pred_fallthru
      _
    %114 = vsyncpa [#allocation3], 1
    %115 = vsyncpa [#allocation6], 1
    %116 = vsyncpa [#allocation4], 1

</llo_original>
